<compile_context>
chip_gen: v7x
topology: tpu7x:2x2x1
jax: 0.10.0
libtpu: 0.0.40
codegen_flags: <defaults>
</compile_context>

<pallas_src>
import jax
import jax.numpy as jnp
from jax.experimental import pallas as pl
from jax.experimental.pallas import tpu as pltpu


def _round_up(n, m):
    return ((n + m - 1) // m) * m


def _hypernet_kernel(x_ref, wt_ref, b_ref, mm_ref, bb_ref):
    # x:  (tb, nfeat)
    # wt: (nfeat, out1_pad + out2_pad)  fused, pre-transposed [down1 | bias]
    # b:  (1,     out1_pad + out2_pad)  fused biases
    # mm: (tb, out1_pad), bb: (tb, out2_pad)   both lane-dense (% 128 == 0)
    acc = jnp.dot(
        x_ref[...], wt_ref[...],
        preferred_element_type=jnp.float32,
        precision=jax.lax.Precision.HIGHEST,
    )
    acc = acc + b_ref[...]          # f32 epilogue; rides in free VPU slack
    split = mm_ref.shape[-1]        # lane-aligned (multiple of 128)
    mm_ref[...] = acc[:, :split].astype(mm_ref.dtype)
    bb_ref[...] = acc[:, split:].astype(bb_ref.dtype)


def prepare_hypernet_params(w1, b1, w2, b2):
    """One-time parameter prep (outside the per-call hot path).

    w1: (nhid1*nhid2, nfeat), b1: (nhid1*nhid2,)   -- down1
    w2: (nhid2, nfeat),       b2: (nhid2,)         -- bias layer
    Returns fused, pre-transposed weights/biases where each block is padded to
    a multiple of 128 lanes (padded lanes have zero weight and zero bias).
    """
    out1, nfeat = w1.shape
    out2 = w2.shape[0]
    out1_pad = _round_up(out1, 128)
    out2_pad = _round_up(out2, 128)

    wt = jnp.zeros((nfeat, out1_pad + out2_pad), w1.dtype)
    wt = wt.at[:, :out1].set(w1.T)
    wt = wt.at[:, out1_pad:out1_pad + out2].set(w2.T)

    b = jnp.zeros((1, out1_pad + out2_pad), b1.dtype)
    b = b.at[:, :out1].set(b1)
    b = b.at[:, out1_pad:out1_pad + out2].set(b2)
    return wt, b


def hypernet_forward(x, wt_fused, b_fused, nhid1, nhid2, *, block_b=2048):
    """x: (B, nfeat); wt_fused/b_fused from prepare_hypernet_params.
    Returns (mm (B, nhid2, nhid1), bb (B, nhid2))."""
    B, nfeat = x.shape
    out1, out2 = nhid1 * nhid2, nhid2
    out1_pad = _round_up(out1, 128)
    out2_pad = _round_up(out2, 128)
    out_pad_total = out1_pad + out2_pad
    assert wt_fused.shape == (nfeat, out_pad_total)
    dtype = x.dtype
    bytes_per = jnp.dtype(dtype).itemsize

    # ---- batch tile selection (VMEM-bounded, megacore-friendly) ----
    resident = (nfeat + 1) * out_pad_total * bytes_per           # W + b, Buffered(1)
    per_row = 2 * (nfeat + out1_pad + out2_pad) * bytes_per      # dbl-buffered x + outs
    budget = 24 << 20                                            # safe on v5e/v6e/v7x
    tb_cap = max(8, ((budget - resident) // per_row) // 8 * 8)
    tb = min(_round_up(block_b, 8), _round_up(B, 8), tb_cap)
    # Keep >= 4 grid steps when B allows so the "parallel" axis feeds both
    # v7x TensorCores (harmless on single-TC v5e/v6e).
    min_steps = min(4, pl.cdiv(B, 8))
    tb = max(8, min(tb, _round_up(pl.cdiv(B, min_steps), 8)))
    grid = (pl.cdiv(B, tb),)        # ragged tail masked by Mosaic; no jnp.pad of x

    vmem_need = resident + tb * per_row
    vmem_limit = int(min(60 << 20, max(16 << 20, vmem_need + (4 << 20))))

    cost = pl.CostEstimate(
        flops=2 * B * nfeat * out_pad_total,
        transcendentals=0,
        bytes_accessed=(x.size + wt_fused.size + b_fused.size
                        + B * out_pad_total) * bytes_per,
    )

    mm_pad, bb_pad = pl.pallas_call(
        _hypernet_kernel,
        out_shape=(
            jax.ShapeDtypeStruct((B, out1_pad), dtype),
            jax.ShapeDtypeStruct((B, out2_pad), dtype),
        ),
        grid_spec=pltpu.PrefetchScalarGridSpec(
            num_scalar_prefetch=0,
            grid=grid,
            in_specs=[
                pl.BlockSpec((tb, nfeat), lambda i: (i, 0)),          # x tile
                pl.BlockSpec((nfeat, out_pad_total), lambda i: (0, 0),
                             pipeline_mode=pl.Buffered(1)),           # resident W
                pl.BlockSpec((1, out_pad_total), lambda i: (0, 0),
                             pipeline_mode=pl.Buffered(1)),           # resident b
            ],
            out_specs=[
                pl.BlockSpec((tb, out1_pad), lambda i: (i, 0)),       # mm (lane-dense)
                pl.BlockSpec((tb, out2_pad), lambda i: (i, 0)),       # bb (lane-dense)
            ],
        ),
        compiler_params=pltpu.CompilerParams(
            dimension_semantics=("parallel",),
            vmem_limit_bytes=vmem_limit,
        ),
        cost_estimate=cost,
    )(x, wt_fused, b_fused)

    # Strip only trailing (zero) pad lanes; apply torch's view(-1, nhid2, nhid1)
    # (the intentional self.nhid1/self.nhid2 swap from __init__).
    mm = mm_pad[:, :out1].reshape(B, nhid2, nhid1)
    bb = bb_pad[:, :out2]
    return mm, bb


def _init_linear(key, out_features, in_features, dtype=jnp.float32):
    """Deterministic PyTorch-style Linear init."""
    kw, kb = jax.random.split(key)
    bound = 1.0 / jnp.sqrt(jnp.asarray(in_features, dtype))
    w = jax.random.uniform(kw, (out_features, in_features), dtype, -bound, bound)
    b = jax.random.uniform(kb, (out_features,), dtype, -bound, bound)
    return w, b


if __name__ == "__main__":
    nfeat, nhid1, nhid2 = 32, 8, 4
    B = 2

    key = jax.random.PRNGKey(0)
    kx, k1, k2 = jax.random.split(key, 3)

    x = jax.random.normal(kx, (B, nfeat), jnp.float32)
    w1, b1 = _init_linear(k1, nhid1 * nhid2, nfeat)   # down1
    w2, b2 = _init_linear(k2, nhid2, nfeat)           # bias layer

    # One-time fused / transposed / per-block lane-padded params.
    wt_fused, b_fused = prepare_hypernet_params(w1, b1, w2, b2)

    mm, bb = hypernet_forward(x, wt_fused, b_fused, nhid1, nhid2)
    jax.block_until_ready((mm, bb))

    # Reference check in plain JAX (same f32 matmul precision as the kernel).
    hi = jax.lax.Precision.HIGHEST
    mm_ref = (jnp.dot(x, w1.T, precision=hi) + b1).reshape(B, nhid2, nhid1)
    bb_ref = jnp.dot(x, w2.T, precision=hi) + b2
    assert mm.shape == (B, nhid2, nhid1) and bb.shape == (B, nhid2)
    assert jnp.allclose(mm, mm_ref, atol=1e-4, rtol=1e-4)
    assert jnp.allclose(bb, bb_ref, atol=1e-4, rtol=1e-4)

    print("KERNEL_OK")
</pallas_src>

<mosaic_0001>
module attributes {stable_mosaic.version = 11 : i64} {
  func.func @_hypernet_kernel(%arg0: i32, %arg1: memref<8x32xf32, #tpu.memory_space<vmem>>, %arg2: memref<32x256xf32, #tpu.memory_space<vmem>>, %arg3: memref<1x256xf32, #tpu.memory_space<vmem>>, %arg4: memref<8x128xf32, #tpu.memory_space<vmem>>, %arg5: memref<8x128xf32, #tpu.memory_space<vmem>>) attributes {dimension_semantics = [#tpu.dimension_semantics<parallel>], iteration_bounds = array<i64: 1>, scalar_prefetch = 0 : i64, scratch_operands = 0 : i64, tpu.core_type = #tpu.core_type<tc>, window_params = [{transform_indices = @transform_0, window_bounds = array<i64: 8, 32>}, {pipeline_mode = #tpu.pipeline_mode<synchronous>, transform_indices = @transform_1, window_bounds = array<i64: 32, 256>}, {pipeline_mode = #tpu.pipeline_mode<synchronous>, transform_indices = @transform_2, window_bounds = array<i64: 1, 256>}, {transform_indices = @transform_3, window_bounds = array<i64: 8, 128>}, {transform_indices = @transform_4, window_bounds = array<i64: 8, 128>}]} {
    %c0 = arith.constant 0 : index
    %c0_0 = arith.constant 0 : index
    %0 = vector.load %arg1[%c0, %c0_0] : memref<8x32xf32, #tpu.memory_space<vmem>>, vector<8x32xf32>
    %c0_1 = arith.constant 0 : index
    %c0_2 = arith.constant 0 : index
    %1 = vector.load %arg2[%c0_1, %c0_2] : memref<32x256xf32, #tpu.memory_space<vmem>>, vector<32x256xf32>
    %cst = arith.constant dense<0.000000e+00> : vector<8x256xf32>
    %2 = tpu.matmul %0, %1, %cst {dimension_numbers = #tpu.dot_dimension_numbers<[1], [0], [0], [1], [0, 0, 1, 1], [], []>, precision = #tpu.contract_precision<fp32>} : vector<8x32xf32>, vector<32x256xf32>, vector<8x256xf32> -> vector<8x256xf32>
    %c0_3 = arith.constant 0 : index
    %c0_4 = arith.constant 0 : index
    %3 = vector.load %arg3[%c0_3, %c0_4] : memref<1x256xf32, #tpu.memory_space<vmem>>, vector<1x256xf32>
    %4 = vector.broadcast %3 : vector<1x256xf32> to vector<8x256xf32>
    %5 = arith.addf %2, %4 : vector<8x256xf32>
    %6 = vector.extract_strided_slice %5 {offsets = [0, 0], sizes = [8, 128], strides = [1, 1]} : vector<8x256xf32> to vector<8x128xf32>
    %c0_5 = arith.constant 0 : index
    %c0_6 = arith.constant 0 : index
    %7 = vector.load %arg4[%c0_5, %c0_6] : memref<8x128xf32, #tpu.memory_space<vmem>>, vector<8x128xf32>
    tpu.vector_store %arg4[%c0_5, %c0_6], %6 {strides = array<i32>} : memref<8x128xf32, #tpu.memory_space<vmem>>, vector<8x128xf32>,
    %8 = vector.extract_strided_slice %5 {offsets = [0, 128], sizes = [8, 128], strides = [1, 1]} : vector<8x256xf32> to vector<8x128xf32>
    %c0_7 = arith.constant 0 : index
    %c0_8 = arith.constant 0 : index
    %9 = vector.load %arg5[%c0_7, %c0_8] : memref<8x128xf32, #tpu.memory_space<vmem>>, vector<8x128xf32>
    tpu.vector_store %arg5[%c0_7, %c0_8], %8 {strides = array<i32>} : memref<8x128xf32, #tpu.memory_space<vmem>>, vector<8x128xf32>,
    return
  }
  func.func @transform_0(%arg0: i32) -> (i32, i32) {
    %c0_i32 = arith.constant 0 : i32
    %c0_i32_0 = arith.constant 0 : i32
    return %arg0, %c0_i32 : i32, i32
  }
  func.func @transform_1(%arg0: i32) -> (i32, i32) {
    %c0_i32 = arith.constant 0 : i32
    %c0_i32_0 = arith.constant 0 : i32
    %c0_i32_1 = arith.constant 0 : i32
    return %c0_i32, %c0_i32_0 : i32, i32
  }
  func.func @transform_2(%arg0: i32) -> (i32, i32) {
    %c0_i32 = arith.constant 0 : i32
    %c0_i32_0 = arith.constant 0 : i32
    %c0_i32_1 = arith.constant 0 : i32
    return %c0_i32, %c0_i32_0 : i32, i32
  }
  func.func @transform_3(%arg0: i32) -> (i32, i32) {
    %c0_i32 = arith.constant 0 : i32
    %c0_i32_0 = arith.constant 0 : i32
    return %arg0, %c0_i32 : i32, i32
  }
  func.func @transform_4(%arg0: i32) -> (i32, i32) {
    %c0_i32 = arith.constant 0 : i32
    %c0_i32_0 = arith.constant 0 : i32
    return %arg0, %c0_i32 : i32, i32
  }
}

</mosaic_0001>

<llo_original>
// kernel: tpu_custom_call.1
$region0: #{tpu_custom_call.1}
  #allocation0 [shape = 'u32[]', space=smem, size = 0x4, offset = 0x4, fixed_abs, tag = 'smem constant byte address 0x4 - core index']
  #allocation1 [shape = 'u32[144,128]{1,0:T(1,128)}', space=vmem, size = 0x12000, scoped, tag = 'internal scratch']
  %s0 = inlined_call_operand.hbm [shape: f32[2,32], index: 0, kind: input, shape index: {}]
  %s1 = inlined_call_operand.hbm [shape: f32[32,256], index: 1, kind: input, shape index: {}]
  %s2 = inlined_call_operand.vmem [shape: f32[1,256], index: 2, kind: input, shape index: {}]
  %s3 = inlined_call_operand.hbm [shape: f32[2,128], index: 3, kind: output, shape index: {0}]
  %s4 = inlined_call_operand.hbm [shape: f32[2,128], index: 4, kind: output, shape index: {1}]
  %5 = xla_tuple %s3, %s4
  %s6 = sld [smem:[#allocation0]]
  $region38: #{tpu_custom_call.1} parent=0
    _
  %s8 = ssub.s32 1, %s6
  %s9 = scalar_select 0, %s8, %s6
  $region1: #{tpu_custom_call.1} parent=0
    #allocation2 [shape = 'u8[4096]{0}', space=vmem, size = 0x1000, scoped, tag = 'input window, operand 0, single buffered']
    #allocation3 [shape = 's32[1]{0}', space=sflag, size = 0x4, scoped, tag = 'scoped memory for tpu_custom_call.1']
    #allocation4 [shape = 's32[1]{0}', space=sflag, size = 0x4, scoped, tag = 'scoped memory for tpu_custom_call.1']
    #allocation5 [shape = 'u8[32768]{0}', space=vmem, size = 0x8000, scoped, tag = 'input window, operand 1, single buffered']
    #allocation6 [shape = 's32[1]{0}', space=sflag, size = 0x4, scoped, tag = 'scoped memory for tpu_custom_call.1']
    #allocation7 [shape = 'u8[4096]{0}', space=vmem, size = 0x1000, scoped, tag = 'output window, operand 0, single buffered']
    #allocation8 [shape = 'u8[4096]{0}', space=vmem, size = 0x1000, scoped, tag = 'output window, operand 1, single buffered']
    #allocation9 [shape = 's32[1]{0}', space=sflag, size = 0x4, scoped, tag = 'scoped memory for tpu_custom_call.1']
    %10 = vsyncpa [#allocation3], 0
    %11 = vsyncpa [#allocation6], 0
    %12 = vsyncpa [#allocation4], 0
    %13 = vsyncpa [#allocation9], 0
    // Predicated region
    $region2: #{tpu_custom_call.1} parent=1 // pred_check
      _
    $region3: #{tpu_custom_call.1} parent=1 // pred_check_branch
      %15 = sbr.rel (0) target = $region5
    $region4: #{tpu_custom_call.1} parent=1 // pred_region
      %s17 = ssub.s32 128, 32
      %18 = vsyncadd [#allocation3], %s17
      %s19 = sshll.u32 [#allocation2], 4
      %s20 = int_to_ptr.vmem [resolvable:$true] %s19
      %25 = dma.hbm_to_vmem [thread:$0]  %s0, 32, %s20, [#allocation3], 32, 32, 2
    $region5: #{tpu_custom_call.1} parent=1 // pred_fallthru
      _
    // Predicated region
    $region6: #{tpu_custom_call.1} parent=1 // pred_check
      _
    $region7: #{tpu_custom_call.1} parent=1 // pred_check_branch
      %27 = sbr.rel (0) target = $region9
    $region8: #{tpu_custom_call.1} parent=1 // pred_region
      %s29 = ssub.s32 1024, 1024
      %30 = vsyncadd [#allocation6], %s29
      %s31 = sshll.u32 [#allocation5], 4
      %s32 = int_to_ptr.vmem [resolvable:$true] %s31
      %37 = dma.hbm_to_vmem [thread:$0]  %s1, 1024, %s32, [#allocation6], 256, 256, 16
    $region9: #{tpu_custom_call.1} parent=1 // pred_fallthru
      _
    // Predicated region
    $region10: #{tpu_custom_call.1} parent=1 // pred_check
      _
    $region11: #{tpu_custom_call.1} parent=1 // pred_check_branch
      %39 = sbr.rel (0) target = $region13
    $region12: #{tpu_custom_call.1} parent=1 // pred_region
      _
    $region13: #{tpu_custom_call.1} parent=1 // pred_fallthru
      _
    // Predicated region
    $region14: #{tpu_custom_call.1} parent=1 // pred_check
      _
    $region15: #{tpu_custom_call.1} parent=1 // pred_check_branch
      %41 = sbr.rel (0) target = $region17
    $region16: #{tpu_custom_call.1} parent=1 // pred_region
      %42 = dma.done [#allocation3], 128
    $region17: #{tpu_custom_call.1} parent=1 // pred_fallthru
      _
    // Predicated region
    $region18: #{tpu_custom_call.1} parent=1 // pred_check
      _
    $region19: #{tpu_custom_call.1} parent=1 // pred_check_branch
      %44 = sbr.rel (0) target = $region21
    $region20: #{tpu_custom_call.1} parent=1 // pred_region
      %45 = dma.done [#allocation6], 1024
    $region21: #{tpu_custom_call.1} parent=1 // pred_fallthru
      _
    %v46 = vld [vmem:[#allocation2] sm:$0xff]
    %v47 = vld [vmem:[#allocation5] sm:$0xff]
    %v48 = vld [vmem:[#allocation5 + $0x8] sm:$0xff]
    %v49 = vld [vmem:[#allocation5 + $0x10] sm:$0xff]
    %v50 = vld [vmem:[#allocation5 + $0x18] sm:$0xff]
    %v51 = vld [vmem:[#allocation5 + $0x20] sm:$0xff]
    %v52 = vld [vmem:[#allocation5 + $0x28] sm:$0xff]
    %v53 = vld [vmem:[#allocation5 + $0x30] sm:$0xff]
    %v54 = vld [vmem:[#allocation5 + $0x38] sm:$0xff]
    %v55 = vld [vmem:[%s2] sm:$0x3]
    %v57 = vlaneseq
    %v58 = vshrl.u32 %v57, 7
    %v59 = vsub.s32 0, %v58
    %v60 = vrot.slane %v55, %v59
    %v61 = vlaneseq
    %v62 = vshrl.u32 %v61, 7
    %v63 = vsub.s32 1, %v62
    %v64 = vrot.slane %v55, %v63
    %vm67 = vcmask 261120
    %v69 = vsel %vm67, %v46, 0
    %v71 = vand.u32 %v48, 4294901760
    %72 = vmatprep.subr.mxu0 %v71
    %v73 = vand.u32 %v47, 4294901760
    %74 = vmatpush1.msra.mxu0 %v73
    %v75 = vand.u32 %v50, 4294901760
    %76 = vmatprep.subr.mxu0 %v75
    %v77 = vand.u32 %v49, 4294901760
    %78 = vmatpush1.msra.mxu0 %v77
    %v79 = vand.u32 %v52, 4294901760
    %80 = vmatprep.subr.mxu0 %v79
    %v81 = vand.u32 %v51, 4294901760
    %82 = vmatpush1.msra.mxu0 %v81
    %v83 = vand.u32 %v54, 4294901760
    %84 = vmatprep.subr.mxu0 %v83
    %v85 = vand.u32 %v53, 4294901760
    %86 = vmatpush1.msra.mxu0 %v85
    %87 = vmatprep.subr.mxu0 0.0
    %88 = vmatpush1.msra.mxu0 0.0
    %89 = vmatprep.subr.mxu0 0.0
    %90 = vmatpush1.msra.mxu0 0.0
    %91 = vmatprep.subr.mxu0 0.0
    %92 = vmatpush1.msra.mxu0 0.0
    %93 = vmatprep.subr.mxu0 0.0
    %94 = vmatpush1.msra.mxu0 0.0
    %95 = vmatprep.subr.mxu0 0.0
    %96 = vmatpush1.msra.mxu0 0.0
    %97 = vmatprep.subr.mxu0 0.0
    %98 = vmatpush1.msra.mxu0 0.0
    %99 = vmatprep.subr.mxu0 0.0
    %100 = vmatpush1.msra.mxu0 0.0
    %101 = vmatprep.subr.mxu0 0.0
    %102 = vmatpush1.msra.mxu0 0.0
    %103 = vmatprep.subr.mxu0 0.0
    %104 = vmatpush1.msra.mxu0 0.0
    %105 = vmatprep.subr.mxu0 0.0
    %106 = vmatpush1.msra.mxu0 0.0
    %107 = vmatprep.subr.mxu0 0.0
    %108 = vmatpush1.msra.mxu0 0.0
    %109 = vmatprep.subr.mxu0 0.0
    %110 = vmatpush1.msra.mxu0 0.0
    %111 = vmatprep.subr.mxu0 0.0
    %112 = vmatpush1.msra.mxu0 0.0
    %113 = vmatprep.subr.mxu0 0.0
    %114 = vmatpush1.msra.mxu0 0.0
    %115 = vmatprep.subr.mxu0 0.0
    %116 = vmatpush1.msra.mxu0 0.0
    %117 = vmatprep.subr.mxu0 0.0
    %118 = vmatpush1.msra.mxu0 0.0
    %119 = vmatprep.subr.mxu0 0.0
    %120 = vmatpush1.msra.mxu0 0.0
    %121 = vmatprep.subr.mxu0 0.0
    %122 = vmatpush1.msra.mxu0 0.0
    %123 = vmatprep.subr.mxu0 0.0
    %124 = vmatpush1.msra.mxu0 0.0
    %125 = vmatprep.subr.mxu0 0.0
    %126 = vmatpush1.msra.mxu0 0.0
    %127 = vmatprep.subr.mxu0 0.0
    %128 = vmatpush1.msra.mxu0 0.0
    %129 = vmatprep.subr.mxu0 0.0
    %130 = vmatpush1.msra.mxu0 0.0
    %131 = vmatprep.subr.mxu0 0.0
    %132 = vmatpush1.msra.mxu0 0.0
    %133 = vmatprep.subr.mxu0 0.0
    %134 = vmatpush1.msra.mxu0 0.0
    %135 = vmatprep.subr.mxu0 0.0
    %136 = vmatpush1.msra.mxu0 0.0
    %137 = vmatprep.subr.mxu0 0.0
    %138 = vmatpush1.msra.mxu0 0.0
    %139 = vmatprep.subr.mxu0 0.0
    %140 = vmatpush1.msra.mxu0 0.0
    %141 = vmatprep.subr.mxu0 0.0
    %142 = vmatpush1.msra.mxu0 0.0
    %143 = vmatprep.mubr.f32.mxu0 0.0
    %v144 = vand.u32 %v69, 4294901760
    %v145 = vsub.f32 %v69, %v144
    %v146 = vand.u32 %v145, 4294901760
    %v147 = vsub.f32 %v145, %v146
    %v148 = vand.u32 %v147, 4294901760
    %149 = vmatmul.mubr.f32.gmra.mrb[0].mxu0 %v148
    %v150 = vpop.f32.mrb[0].mxu0
    %v151 = vadd.f32 %v60, %v150
    %v152 = vpop.f32.mrb[0].mxu0
    %v153 = vadd.f32 %v64, %v152
    %154 = vdwg.mxu0
    %v155 = vand.u32 %v48, 4294901760
    %v156 = vsub.f32 %v48, %v155
    %v157 = vand.u32 %v156, 4294901760
    %v158 = vsub.f32 %v156, %v157
    %v159 = vand.u32 %v158, 4294901760
    %160 = vmatprep.subr.mxu0 %v159
    %v161 = vand.u32 %v47, 4294901760
    %v162 = vsub.f32 %v47, %v161
    %v163 = vand.u32 %v162, 4294901760
    %v164 = vsub.f32 %v162, %v163
    %v165 = vand.u32 %v164, 4294901760
    %166 = vmatpush1.msra.mxu0 %v165
    %v167 = vand.u32 %v50, 4294901760
    %v168 = vsub.f32 %v50, %v167
    %v169 = vand.u32 %v168, 4294901760
    %v170 = vsub.f32 %v168, %v169
    %v171 = vand.u32 %v170, 4294901760
    %172 = vmatprep.subr.mxu0 %v171
    %v173 = vand.u32 %v49, 4294901760
    %v174 = vsub.f32 %v49, %v173
    %v175 = vand.u32 %v174, 4294901760
    %v176 = vsub.f32 %v174, %v175
    %v177 = vand.u32 %v176, 4294901760
    %178 = vmatpush1.msra.mxu0 %v177
    %v179 = vand.u32 %v52, 4294901760
    %v180 = vsub.f32 %v52, %v179
    %v181 = vand.u32 %v180, 4294901760
    %v182 = vsub.f32 %v180, %v181
    %v183 = vand.u32 %v182, 4294901760
    %184 = vmatprep.subr.mxu0 %v183
    %v185 = vand.u32 %v51, 4294901760
    %v186 = vsub.f32 %v51, %v185
    %v187 = vand.u32 %v186, 4294901760
    %v188 = vsub.f32 %v186, %v187
    %v189 = vand.u32 %v188, 4294901760
    %190 = vmatpush1.msra.mxu0 %v189
    %v191 = vand.u32 %v54, 4294901760
    %v192 = vsub.f32 %v54, %v191
    %v193 = vand.u32 %v192, 4294901760
    %v194 = vsub.f32 %v192, %v193
    %v195 = vand.u32 %v194, 4294901760
    %196 = vmatprep.subr.mxu0 %v195
    %v197 = vand.u32 %v53, 4294901760
    %v198 = vsub.f32 %v53, %v197
    %v199 = vand.u32 %v198, 4294901760
    %v200 = vsub.f32 %v198, %v199
    %v201 = vand.u32 %v200, 4294901760
    %202 = vmatpush1.msra.mxu0 %v201
    %203 = vmatprep.subr.mxu0 0.0
    %204 = vmatpush1.msra.mxu0 0.0
    %205 = vmatprep.subr.mxu0 0.0
    %206 = vmatpush1.msra.mxu0 0.0
    %207 = vmatprep.subr.mxu0 0.0
    %208 = vmatpush1.msra.mxu0 0.0
    %209 = vmatprep.subr.mxu0 0.0
    %210 = vmatpush1.msra.mxu0 0.0
    %211 = vmatprep.subr.mxu0 0.0
    %212 = vmatpush1.msra.mxu0 0.0
    %213 = vmatprep.subr.mxu0 0.0
    %214 = vmatpush1.msra.mxu0 0.0
    %215 = vmatprep.subr.mxu0 0.0
    %216 = vmatpush1.msra.mxu0 0.0
    %217 = vmatprep.subr.mxu0 0.0
    %218 = vmatpush1.msra.mxu0 0.0
    %219 = vmatprep.subr.mxu0 0.0
    %220 = vmatpush1.msra.mxu0 0.0
    %221 = vmatprep.subr.mxu0 0.0
    %222 = vmatpush1.msra.mxu0 0.0
    %223 = vmatprep.subr.mxu0 0.0
    %224 = vmatpush1.msra.mxu0 0.0
    %225 = vmatprep.subr.mxu0 0.0
    %226 = vmatpush1.msra.mxu0 0.0
    %227 = vmatprep.subr.mxu0 0.0
    %228 = vmatpush1.msra.mxu0 0.0
    %229 = vmatprep.subr.mxu0 0.0
    %230 = vmatpush1.msra.mxu0 0.0
    %231 = vmatprep.subr.mxu0 0.0
    %232 = vmatpush1.msra.mxu0 0.0
    %233 = vmatprep.subr.mxu0 0.0
    %234 = vmatpush1.msra.mxu0 0.0
    %235 = vmatprep.subr.mxu0 0.0
    %236 = vmatpush1.msra.mxu0 0.0
    %237 = vmatprep.subr.mxu0 0.0
    %238 = vmatpush1.msra.mxu0 0.0
    %239 = vmatprep.subr.mxu0 0.0
    %240 = vmatpush1.msra.mxu0 0.0
    %241 = vmatprep.subr.mxu0 0.0
    %242 = vmatpush1.msra.mxu0 0.0
    %243 = vmatprep.subr.mxu0 0.0
    %244 = vmatpush1.msra.mxu0 0.0
    %245 = vmatprep.subr.mxu0 0.0
    %246 = vmatpush1.msra.mxu0 0.0
    %247 = vmatprep.subr.mxu0 0.0
    %248 = vmatpush1.msra.mxu0 0.0
    %249 = vmatprep.subr.mxu0 0.0
    %250 = vmatpush1.msra.mxu0 0.0
    %251 = vmatprep.subr.mxu0 0.0
    %252 = vmatpush1.msra.mxu0 0.0
    %253 = vmatprep.subr.mxu0 0.0
    %254 = vmatpush1.msra.mxu0 0.0
    %255 = vmatprep.subr.mxu0 0.0
    %256 = vmatpush1.msra.mxu0 0.0
    %257 = vmatprep.subr.mxu0 0.0
    %258 = vmatpush1.msra.mxu0 0.0
    %259 = vmatprep.mubr.f32.mxu0 0.0
    %v260 = vand.u32 %v69, 4294901760
    %261 = vmatmul.mubr.f32.gmra.mrb[0].mxu0 %v260
    %v262 = vpop.f32.mrb[0].mxu0
    %v263 = vadd.f32 %v151, %v262
    %v264 = vpop.f32.mrb[0].mxu0
    %v265 = vadd.f32 %v153, %v264
    %266 = vdwg.mxu0
    %v267 = vand.u32 %v48, 4294901760
    %v268 = vsub.f32 %v48, %v267
    %269 = vmatprep.subr.mxu0 %v268
    %v270 = vand.u32 %v47, 4294901760
    %v271 = vsub.f32 %v47, %v270
    %272 = vmatpush1.msra.mxu0 %v271
    %v273 = vand.u32 %v50, 4294901760
    %v274 = vsub.f32 %v50, %v273
    %275 = vmatprep.subr.mxu0 %v274
    %v276 = vand.u32 %v49, 4294901760
    %v277 = vsub.f32 %v49, %v276
    %278 = vmatpush1.msra.mxu0 %v277
    %v279 = vand.u32 %v52, 4294901760
    %v280 = vsub.f32 %v52, %v279
    %281 = vmatprep.subr.mxu0 %v280
    %v282 = vand.u32 %v51, 4294901760
    %v283 = vsub.f32 %v51, %v282
    %284 = vmatpush1.msra.mxu0 %v283
    %v285 = vand.u32 %v54, 4294901760
    %v286 = vsub.f32 %v54, %v285
    %287 = vmatprep.subr.mxu0 %v286
    %v288 = vand.u32 %v53, 4294901760
    %v289 = vsub.f32 %v53, %v288
    %290 = vmatpush1.msra.mxu0 %v289
    %291 = vmatprep.subr.mxu0 0.0
    %292 = vmatpush1.msra.mxu0 0.0
    %293 = vmatprep.subr.mxu0 0.0
    %294 = vmatpush1.msra.mxu0 0.0
    %295 = vmatprep.subr.mxu0 0.0
    %296 = vmatpush1.msra.mxu0 0.0
    %297 = vmatprep.subr.mxu0 0.0
    %298 = vmatpush1.msra.mxu0 0.0
    %299 = vmatprep.subr.mxu0 0.0
    %300 = vmatpush1.msra.mxu0 0.0
    %301 = vmatprep.subr.mxu0 0.0
    %302 = vmatpush1.msra.mxu0 0.0
    %303 = vmatprep.subr.mxu0 0.0
    %304 = vmatpush1.msra.mxu0 0.0
    %305 = vmatprep.subr.mxu0 0.0
    %306 = vmatpush1.msra.mxu0 0.0
    %307 = vmatprep.subr.mxu0 0.0
    %308 = vmatpush1.msra.mxu0 0.0
    %309 = vmatprep.subr.mxu0 0.0
    %310 = vmatpush1.msra.mxu0 0.0
    %311 = vmatprep.subr.mxu0 0.0
    %312 = vmatpush1.msra.mxu0 0.0
    %313 = vmatprep.subr.mxu0 0.0
    %314 = vmatpush1.msra.mxu0 0.0
    %315 = vmatprep.subr.mxu0 0.0
    %316 = vmatpush1.msra.mxu0 0.0
    %317 = vmatprep.subr.mxu0 0.0
    %318 = vmatpush1.msra.mxu0 0.0
    %319 = vmatprep.subr.mxu0 0.0
    %320 = vmatpush1.msra.mxu0 0.0
    %321 = vmatprep.subr.mxu0 0.0
    %322 = vmatpush1.msra.mxu0 0.0
    %323 = vmatprep.subr.mxu0 0.0
    %324 = vmatpush1.msra.mxu0 0.0
    %325 = vmatprep.subr.mxu0 0.0
    %326 = vmatpush1.msra.mxu0 0.0
    %327 = vmatprep.subr.mxu0 0.0
    %328 = vmatpush1.msra.mxu0 0.0
    %329 = vmatprep.subr.mxu0 0.0
    %330 = vmatpush1.msra.mxu0 0.0
    %331 = vmatprep.subr.mxu0 0.0
    %332 = vmatpush1.msra.mxu0 0.0
    %333 = vmatprep.subr.mxu0 0.0
    %334 = vmatpush1.msra.mxu0 0.0
    %335 = vmatprep.subr.mxu0 0.0
    %336 = vmatpush1.msra.mxu0 0.0
    %337 = vmatprep.subr.mxu0 0.0
    %338 = vmatpush1.msra.mxu0 0.0
    %339 = vmatprep.subr.mxu0 0.0
    %340 = vmatpush1.msra.mxu0 0.0
    %341 = vmatprep.subr.mxu0 0.0
    %342 = vmatpush1.msra.mxu0 0.0
    %343 = vmatprep.subr.mxu0 0.0
    %344 = vmatpush1.msra.mxu0 0.0
    %345 = vmatprep.subr.mxu0 0.0
    %346 = vmatpush1.msra.mxu0 0.0
    %347 = vmatprep.mubr.f32.mxu0 0.0
    %v348 = vand.u32 %v69, 4294901760
    %v349 = vsub.f32 %v69, %v348
    %350 = vmatmul.mubr.f32.gmra.mrb[0].mxu0 %v349
    %v351 = vpop.f32.mrb[0].mxu0
    %v352 = vadd.f32 %v263, %v351
    %v353 = vpop.f32.mrb[0].mxu0
    %v354 = vadd.f32 %v265, %v353
    %355 = vdwg.mxu0
    %v356 = vand.u32 %v48, 4294901760
    %357 = vmatprep.subr.mxu0 %v356
    %v358 = vand.u32 %v47, 4294901760
    %359 = vmatpush1.msra.mxu0 %v358
    %v360 = vand.u32 %v50, 4294901760
    %361 = vmatprep.subr.mxu0 %v360
    %v362 = vand.u32 %v49, 4294901760
    %363 = vmatpush1.msra.mxu0 %v362
    %v364 = vand.u32 %v52, 4294901760
    %365 = vmatprep.subr.mxu0 %v364
    %v366 = vand.u32 %v51, 4294901760
    %367 = vmatpush1.msra.mxu0 %v366
    %v368 = vand.u32 %v54, 4294901760
    %369 = vmatprep.subr.mxu0 %v368
    %v370 = vand.u32 %v53, 4294901760
    %371 = vmatpush1.msra.mxu0 %v370
    %372 = vmatprep.subr.mxu0 0.0
    %373 = vmatpush1.msra.mxu0 0.0
    %374 = vmatprep.subr.mxu0 0.0
    %375 = vmatpush1.msra.mxu0 0.0
    %376 = vmatprep.subr.mxu0 0.0
    %377 = vmatpush1.msra.mxu0 0.0
    %378 = vmatprep.subr.mxu0 0.0
    %379 = vmatpush1.msra.mxu0 0.0
    %380 = vmatprep.subr.mxu0 0.0
    %381 = vmatpush1.msra.mxu0 0.0
    %382 = vmatprep.subr.mxu0 0.0
    %383 = vmatpush1.msra.mxu0 0.0
    %384 = vmatprep.subr.mxu0 0.0
    %385 = vmatpush1.msra.mxu0 0.0
    %386 = vmatprep.subr.mxu0 0.0
    %387 = vmatpush1.msra.mxu0 0.0
    %388 = vmatprep.subr.mxu0 0.0
    %389 = vmatpush1.msra.mxu0 0.0
    %390 = vmatprep.subr.mxu0 0.0
    %391 = vmatpush1.msra.mxu0 0.0
    %392 = vmatprep.subr.mxu0 0.0
    %393 = vmatpush1.msra.mxu0 0.0
    %394 = vmatprep.subr.mxu0 0.0
    %395 = vmatpush1.msra.mxu0 0.0
    %396 = vmatprep.subr.mxu0 0.0
    %397 = vmatpush1.msra.mxu0 0.0
    %398 = vmatprep.subr.mxu0 0.0
    %399 = vmatpush1.msra.mxu0 0.0
    %400 = vmatprep.subr.mxu0 0.0
    %401 = vmatpush1.msra.mxu0 0.0
    %402 = vmatprep.subr.mxu0 0.0
    %403 = vmatpush1.msra.mxu0 0.0
    %404 = vmatprep.subr.mxu0 0.0
    %405 = vmatpush1.msra.mxu0 0.0
    %406 = vmatprep.subr.mxu0 0.0
    %407 = vmatpush1.msra.mxu0 0.0
    %408 = vmatprep.subr.mxu0 0.0
    %409 = vmatpush1.msra.mxu0 0.0
    %410 = vmatprep.subr.mxu0 0.0
    %411 = vmatpush1.msra.mxu0 0.0
    %412 = vmatprep.subr.mxu0 0.0
    %413 = vmatpush1.msra.mxu0 0.0
    %414 = vmatprep.subr.mxu0 0.0
    %415 = vmatpush1.msra.mxu0 0.0
    %416 = vmatprep.subr.mxu0 0.0
    %417 = vmatpush1.msra.mxu0 0.0
    %418 = vmatprep.subr.mxu0 0.0
    %419 = vmatpush1.msra.mxu0 0.0
    %420 = vmatprep.subr.mxu0 0.0
    %421 = vmatpush1.msra.mxu0 0.0
    %422 = vmatprep.subr.mxu0 0.0
    %423 = vmatpush1.msra.mxu0 0.0
    %424 = vmatprep.subr.mxu0 0.0
    %425 = vmatpush1.msra.mxu0 0.0
    %426 = vmatprep.subr.mxu0 0.0
    %427 = vmatpush1.msra.mxu0 0.0
    %428 = vmatprep.mubr.f32.mxu0 0.0
    %v429 = vand.u32 %v69, 4294901760
    %v430 = vsub.f32 %v69, %v429
    %v431 = vand.u32 %v430, 4294901760
    %432 = vmatmul.mubr.f32.gmra.mrb[0].mxu0 %v431
    %v433 = vpop.f32.mrb[0].mxu0
    %v434 = vadd.f32 %v352, %v433
    %v435 = vpop.f32.mrb[0].mxu0
    %v436 = vadd.f32 %v354, %v435
    %437 = vdwg.mxu0
    %v438 = vand.u32 %v48, 4294901760
    %v439 = vsub.f32 %v48, %v438
    %v440 = vand.u32 %v439, 4294901760
    %441 = vmatprep.subr.mxu0 %v440
    %v442 = vand.u32 %v47, 4294901760
    %v443 = vsub.f32 %v47, %v442
    %v444 = vand.u32 %v443, 4294901760
    %445 = vmatpush1.msra.mxu0 %v444
    %v446 = vand.u32 %v50, 4294901760
    %v447 = vsub.f32 %v50, %v446
    %v448 = vand.u32 %v447, 4294901760
    %449 = vmatprep.subr.mxu0 %v448
    %v450 = vand.u32 %v49, 4294901760
    %v451 = vsub.f32 %v49, %v450
    %v452 = vand.u32 %v451, 4294901760
    %453 = vmatpush1.msra.mxu0 %v452
    %v454 = vand.u32 %v52, 4294901760
    %v455 = vsub.f32 %v52, %v454
    %v456 = vand.u32 %v455, 4294901760
    %457 = vmatprep.subr.mxu0 %v456
    %v458 = vand.u32 %v51, 4294901760
    %v459 = vsub.f32 %v51, %v458
    %v460 = vand.u32 %v459, 4294901760
    %461 = vmatpush1.msra.mxu0 %v460
    %v462 = vand.u32 %v54, 4294901760
    %v463 = vsub.f32 %v54, %v462
    %v464 = vand.u32 %v463, 4294901760
    %465 = vmatprep.subr.mxu0 %v464
    %v466 = vand.u32 %v53, 4294901760
    %v467 = vsub.f32 %v53, %v466
    %v468 = vand.u32 %v467, 4294901760
    %469 = vmatpush1.msra.mxu0 %v468
    %470 = vmatprep.subr.mxu0 0.0
    %471 = vmatpush1.msra.mxu0 0.0
    %472 = vmatprep.subr.mxu0 0.0
    %473 = vmatpush1.msra.mxu0 0.0
    %474 = vmatprep.subr.mxu0 0.0
    %475 = vmatpush1.msra.mxu0 0.0
    %476 = vmatprep.subr.mxu0 0.0
    %477 = vmatpush1.msra.mxu0 0.0
    %478 = vmatprep.subr.mxu0 0.0
    %479 = vmatpush1.msra.mxu0 0.0
    %480 = vmatprep.subr.mxu0 0.0
    %481 = vmatpush1.msra.mxu0 0.0
    %482 = vmatprep.subr.mxu0 0.0
    %483 = vmatpush1.msra.mxu0 0.0
    %484 = vmatprep.subr.mxu0 0.0
    %485 = vmatpush1.msra.mxu0 0.0
    %486 = vmatprep.subr.mxu0 0.0
    %487 = vmatpush1.msra.mxu0 0.0
    %488 = vmatprep.subr.mxu0 0.0
    %489 = vmatpush1.msra.mxu0 0.0
    %490 = vmatprep.subr.mxu0 0.0
    %491 = vmatpush1.msra.mxu0 0.0
    %492 = vmatprep.subr.mxu0 0.0
    %493 = vmatpush1.msra.mxu0 0.0
    %494 = vmatprep.subr.mxu0 0.0
    %495 = vmatpush1.msra.mxu0 0.0
    %496 = vmatprep.subr.mxu0 0.0
    %497 = vmatpush1.msra.mxu0 0.0
    %498 = vmatprep.subr.mxu0 0.0
    %499 = vmatpush1.msra.mxu0 0.0
    %500 = vmatprep.subr.mxu0 0.0
    %501 = vmatpush1.msra.mxu0 0.0
    %502 = vmatprep.subr.mxu0 0.0
    %503 = vmatpush1.msra.mxu0 0.0
    %504 = vmatprep.subr.mxu0 0.0
    %505 = vmatpush1.msra.mxu0 0.0
    %506 = vmatprep.subr.mxu0 0.0
    %507 = vmatpush1.msra.mxu0 0.0
    %508 = vmatprep.subr.mxu0 0.0
    %509 = vmatpush1.msra.mxu0 0.0
    %510 = vmatprep.subr.mxu0 0.0
    %511 = vmatpush1.msra.mxu0 0.0
    %512 = vmatprep.subr.mxu0 0.0
    %513 = vmatpush1.msra.mxu0 0.0
    %514 = vmatprep.subr.mxu0 0.0
    %515 = vmatpush1.msra.mxu0 0.0
    %516 = vmatprep.subr.mxu0 0.0
    %517 = vmatpush1.msra.mxu0 0.0
    %518 = vmatprep.subr.mxu0 0.0
    %519 = vmatpush1.msra.mxu0 0.0
    %520 = vmatprep.subr.mxu0 0.0
    %521 = vmatpush1.msra.mxu0 0.0
    %522 = vmatprep.subr.mxu0 0.0
    %523 = vmatpush1.msra.mxu0 0.0
    %524 = vmatprep.subr.mxu0 0.0
    %525 = vmatpush1.msra.mxu0 0.0
    %526 = vmatprep.mubr.f32.mxu0 0.0
    %v527 = vand.u32 %v69, 4294901760
    %528 = vmatmul.mubr.f32.gmra.mrb[0].mxu0 %v527
    %v529 = vpop.f32.mrb[0].mxu0
    %v530 = vadd.f32 %v434, %v529
    %v531 = vpop.f32.mrb[0].mxu0
    %v532 = vadd.f32 %v436, %v531
    %533 = vdwg.mxu0
    %v534 = vand.u32 %v48, 4294901760
    %535 = vmatprep.subr.mxu0 %v534
    %v536 = vand.u32 %v47, 4294901760
    %537 = vmatpush1.msra.mxu0 %v536
    %v538 = vand.u32 %v50, 4294901760
    %539 = vmatprep.subr.mxu0 %v538
    %v540 = vand.u32 %v49, 4294901760
    %541 = vmatpush1.msra.mxu0 %v540
    %v542 = vand.u32 %v52, 4294901760
    %543 = vmatprep.subr.mxu0 %v542
    %v544 = vand.u32 %v51, 4294901760
    %545 = vmatpush1.msra.mxu0 %v544
    %v546 = vand.u32 %v54, 4294901760
    %547 = vmatprep.subr.mxu0 %v546
    %v548 = vand.u32 %v53, 4294901760
    %549 = vmatpush1.msra.mxu0 %v548
    %550 = vmatprep.subr.mxu0 0.0
    %551 = vmatpush1.msra.mxu0 0.0
    %552 = vmatprep.subr.mxu0 0.0
    %553 = vmatpush1.msra.mxu0 0.0
    %554 = vmatprep.subr.mxu0 0.0
    %555 = vmatpush1.msra.mxu0 0.0
    %556 = vmatprep.subr.mxu0 0.0
    %557 = vmatpush1.msra.mxu0 0.0
    %558 = vmatprep.subr.mxu0 0.0
    %559 = vmatpush1.msra.mxu0 0.0
    %560 = vmatprep.subr.mxu0 0.0
    %561 = vmatpush1.msra.mxu0 0.0
    %562 = vmatprep.subr.mxu0 0.0
    %563 = vmatpush1.msra.mxu0 0.0
    %564 = vmatprep.subr.mxu0 0.0
    %565 = vmatpush1.msra.mxu0 0.0
    %566 = vmatprep.subr.mxu0 0.0
    %567 = vmatpush1.msra.mxu0 0.0
    %568 = vmatprep.subr.mxu0 0.0
    %569 = vmatpush1.msra.mxu0 0.0
    %570 = vmatprep.subr.mxu0 0.0
    %571 = vmatpush1.msra.mxu0 0.0
    %572 = vmatprep.subr.mxu0 0.0
    %573 = vmatpush1.msra.mxu0 0.0
    %574 = vmatprep.subr.mxu0 0.0
    %575 = vmatpush1.msra.mxu0 0.0
    %576 = vmatprep.subr.mxu0 0.0
    %577 = vmatpush1.msra.mxu0 0.0
    %578 = vmatprep.subr.mxu0 0.0
    %579 = vmatpush1.msra.mxu0 0.0
    %580 = vmatprep.subr.mxu0 0.0
    %581 = vmatpush1.msra.mxu0 0.0
    %582 = vmatprep.subr.mxu0 0.0
    %583 = vmatpush1.msra.mxu0 0.0
    %584 = vmatprep.subr.mxu0 0.0
    %585 = vmatpush1.msra.mxu0 0.0
    %586 = vmatprep.subr.mxu0 0.0
    %587 = vmatpush1.msra.mxu0 0.0
    %588 = vmatprep.subr.mxu0 0.0
    %589 = vmatpush1.msra.mxu0 0.0
    %590 = vmatprep.subr.mxu0 0.0
    %591 = vmatpush1.msra.mxu0 0.0
    %592 = vmatprep.subr.mxu0 0.0
    %593 = vmatpush1.msra.mxu0 0.0
    %594 = vmatprep.subr.mxu0 0.0
    %595 = vmatpush1.msra.mxu0 0.0
    %596 = vmatprep.subr.mxu0 0.0
    %597 = vmatpush1.msra.mxu0 0.0
    %598 = vmatprep.subr.mxu0 0.0
    %599 = vmatpush1.msra.mxu0 0.0
    %600 = vmatprep.subr.mxu0 0.0
    %601 = vmatpush1.msra.mxu0 0.0
    %602 = vmatprep.subr.mxu0 0.0
    %603 = vmatpush1.msra.mxu0 0.0
    %604 = vmatprep.subr.mxu0 0.0
    %605 = vmatpush1.msra.mxu0 0.0
    %606 = vmatprep.mubr.f32.mxu0 0.0
    %v607 = vand.u32 %v69, 4294901760
    %608 = vmatmul.mubr.f32.gmra.mrb[0].mxu0 %v607
    %v609 = vpop.f32.mrb[0].mxu0
    %v610 = vadd.f32 %v530, %v609
    %v611 = vpop.f32.mrb[0].mxu0
    %v612 = vadd.f32 %v532, %v611
    %613 = vdwg.mxu0
    %614 = vst [vmem:[#allocation7] sm:$0xff] %v610
    %615 = vst [vmem:[#allocation8] sm:$0xff] %v612
    // Predicated region
    $region22: #{tpu_custom_call.1} parent=1 // pred_check
      _
    $region23: #{tpu_custom_call.1} parent=1 // pred_check_branch
      %617 = sbr.rel (0) target = $region25
    $region24: #{tpu_custom_call.1} parent=1 // pred_region
      %s619 = ssub.s32 128, 32
      %620 = vsyncadd [#allocation4], %s619
      %s621 = sshll.u32 [#allocation7], 4
      %s622 = int_to_ptr.vmem [resolvable:$true] %s621
      %627 = dma.vmem_to_hbm [thread:$0]  %s622, 32, %s3, [#allocation4], 32, 32, 2
    $region25: #{tpu_custom_call.1} parent=1 // pred_fallthru
      _
    // Predicated region
    $region26: #{tpu_custom_call.1} parent=1 // pred_check
      _
    $region27: #{tpu_custom_call.1} parent=1 // pred_check_branch
      %629 = sbr.rel (0) target = $region29
    $region28: #{tpu_custom_call.1} parent=1 // pred_region
      %s631 = ssub.s32 128, 32
      %632 = vsyncadd [#allocation9], %s631
      %s633 = sshll.u32 [#allocation8], 4
      %s634 = int_to_ptr.vmem [resolvable:$true] %s633
      %639 = dma.vmem_to_hbm [thread:$0]  %s634, 32, %s4, [#allocation9], 32, 32, 2
    $region29: #{tpu_custom_call.1} parent=1 // pred_fallthru
      _
    // Predicated region
    $region30: #{tpu_custom_call.1} parent=1 // pred_check
      _
    $region31: #{tpu_custom_call.1} parent=1 // pred_check_branch
      %641 = sbr.rel (0) target = $region33
    $region32: #{tpu_custom_call.1} parent=1 // pred_region
      %642 = dma.done [#allocation4], 128
    $region33: #{tpu_custom_call.1} parent=1 // pred_fallthru
      _
    // Predicated region
    $region34: #{tpu_custom_call.1} parent=1 // pred_check
      _
    $region35: #{tpu_custom_call.1} parent=1 // pred_check_branch
      %644 = sbr.rel (0) target = $region37
    $region36: #{tpu_custom_call.1} parent=1 // pred_region
      %645 = dma.done [#allocation9], 128
    $region37: #{tpu_custom_call.1} parent=1 // pred_fallthru
      _
    %646 = vsyncpa [#allocation3], 1
    %647 = vsyncpa [#allocation6], 1
    %648 = vsyncpa [#allocation4], 1
    %649 = vsyncpa [#allocation9], 1

</llo_original>
